<compile_context>
chip_gen: v6e
topology: v6e:2x2x1
jax: 0.10.0
libtpu: 0.0.40
codegen_flags: <defaults>
</compile_context>

<pallas_src>
import math
import numpy as np
import jax
import jax.numpy as jnp
from jax.experimental import pallas as pl
from jax.experimental.pallas import tpu as pltpu


# ----------------------------- Pallas kernel --------------------------------

def _istft_fused_kernel(x_ref, w_ref, invn_ref, o_ref):
    """out = (X_slab @ W) * inv_norm
       x_ref   : (TJ, Kp)  bf16 frame slab for TJ output tiles
       w_ref   : (Kp, PT)  bf16 window-folded, overlap-add-positioned filterbank
       invn_ref: (TJ, PT)  f32  window.sum() / norm  (norm < 1e-10 -> 1)
    """
    acc = jnp.dot(x_ref[...], w_ref[...], preferred_element_type=jnp.float32)
    o_ref[...] = (acc * invn_ref[...]).astype(o_ref.dtype)


# ------------------------------ host helpers ---------------------------------

def _hann_window(length):
    n = np.arange(length)
    return (0.5 - 0.5 * np.cos(2.0 * np.pi * n / length)).astype(np.float32)


def _round_up(x, m):
    return ((x + m - 1) // m) * m


def _pick_row_tile(n_rows, kp, pt, *, tj_max=512, vmem_budget=12 * 1024 * 1024):
    """Rows (output tiles) per kernel block: as large as the VMEM budget allows,
    trading padded-row waste against per-grid-step pipeline overhead (~0.35us)."""
    per_row = kp * 2 * 2 + pt * 4 * 2 + pt * 4 * 2   # 2x-buffered bf16 X + f32 invn + f32 out
    fixed = kp * pt * 2 * 2                          # bf16 W (double-buffered)
    cap = (vmem_budget - fixed) // per_row if vmem_budget > fixed else 64
    cap = int(max(64, min(tj_max, (cap // 8) * 8)))
    n8 = _round_up(n_rows, 8)
    if n8 <= cap:                                    # whole workload in one block
        return n8
    overhead_rows = 128                              # step overhead in row-equivalents
    best_tj, best_cost = None, None
    for tj in range(cap, 63, -8):                    # descending: prefer larger on ties
        nb = -(-n_rows // tj)
        cost = nb * tj + overhead_rows * nb
        if best_cost is None or cost < best_cost:
            best_tj, best_cost = tj, cost
    return best_tj


# ------------------------------ host wrapper ---------------------------------

def istft_pallas(data, inverse_filters, window, hop_length, original_length,
                 fold_batch=None):
    B, T, F, C = data.shape
    L = int(window.shape[0])
    hop = int(hop_length)
    assert L % hop == 0, "kernel assumes hop_length divides filter_length"

    BC = B * C
    P = (T - 1) * hop + L                       # output_length a matching transform() sets
    R = L // hop                                # frames overlapping any interior sample
    PT = (128 * hop) // math.gcd(128, hop)      # output tile width: lane-dense & hop-aligned
    S = PT // hop                               # new frames per output tile
    FR = S + R - 1                              # frames touching one output tile
    K = FR * F
    Kp = _round_up(K, 128)                      # lane-aligned matmul K

    n_tiles = -(-P // PT)                       # output tiles per (batch, channel)
    if fold_batch is None:
        fold_batch = n_tiles < 128              # small per-batch M -> merge batch into M

    # ---- host-precomputed constants (numpy / f32) ---------------------------
    win = np.asarray(window, dtype=np.float32)
    filt = np.asarray(inverse_filters, dtype=np.float32)
    filt_w = filt * win[None, :]                # synthesis window folded into the filter

    # banded positioned filterbank: W[dt*F + f, q] = filt_w[f, q + (L-hop) - dt*hop]
    W = np.zeros((Kp, PT), dtype=np.float32)
    q = np.arange(PT)
    for dt in range(FR):
        l_idx = q + (L - hop) - dt * hop
        valid = (l_idx >= 0) & (l_idx < L)
        W[dt * F:(dt + 1) * F, valid] = filt_w[:, l_idx[valid]]
    W = jnp.asarray(W, dtype=jnp.bfloat16)

    # window^2 overlap-add normalization; window.sum() scale folded in here (stays f32)
    norm = np.zeros((n_tiles * PT,), dtype=np.float32)
    for t in range(T):
        norm[t * hop:t * hop + L] += win * win
    inv_norm = (win.sum() / np.where(norm < 1e-10, 1.0, norm)).astype(np.float32)
    inv_norm = inv_norm.reshape(n_tiles, PT)

    # ---- glue reshapes / padding (bf16, linear cost) -------------------------
    x = jnp.transpose(data, (0, 3, 1, 2)).reshape(BC, T, F).astype(jnp.bfloat16)
    T_padf = n_tiles * S + R - 1                # front pad = R-1 zero frames
    x = jnp.pad(x, ((0, 0), (R - 1, T_padf - T - (R - 1)), (0, 0)))
    x_tiles = jnp.stack(
        [x[:, dt: dt + n_tiles * S: S, :] for dt in range(FR)], axis=2)
    x_tiles = x_tiles.reshape(BC, n_tiles, K)
    if Kp > K:
        x_tiles = jnp.pad(x_tiles, ((0, 0), (0, 0), (0, Kp - K)))

    if fold_batch:
        # fold (batch*channels, tiles) into one matmul-M axis
        n_rows = BC * n_tiles
        TJ = _pick_row_tile(n_rows, Kp, PT)
        n_rows_pad = _round_up(n_rows, TJ)
        x_in = x_tiles.reshape(1, n_rows, Kp)
        x_in = jnp.pad(x_in, ((0, 0), (0, n_rows_pad - n_rows), (0, 0)))
        invn = jnp.asarray(np.tile(inv_norm, (BC, 1)))
        invn = jnp.pad(invn, ((0, n_rows_pad - n_rows), (0, 0)))
        BC_eff = 1
    else:
        n_rows = n_tiles
        TJ = _pick_row_tile(n_rows, Kp, PT)
        n_rows_pad = _round_up(n_rows, TJ)
        x_in = jnp.pad(x_tiles, ((0, 0), (0, n_rows_pad - n_rows), (0, 0)))
        invn = jnp.pad(jnp.asarray(inv_norm), ((0, n_rows_pad - n_rows), (0, 0)))
        BC_eff = BC

    # batch innermost: W and the batch-invariant inv_norm block are fetched once per m-block
    grid = (n_rows_pad // TJ, BC_eff)
    out = pl.pallas_call(
        _istft_fused_kernel,
        out_shape=jax.ShapeDtypeStruct((BC_eff, n_rows_pad, PT), jnp.float32),
        grid=grid,
        in_specs=[
            pl.BlockSpec((None, TJ, Kp), lambda m, b: (b, m, 0)),
            pl.BlockSpec((Kp, PT), lambda m, b: (0, 0)),
            pl.BlockSpec((TJ, PT), lambda m, b: (m, 0)),
        ],
        out_specs=pl.BlockSpec((None, TJ, PT), lambda m, b: (b, m, 0)),
        compiler_params=pltpu.CompilerParams(
            dimension_semantics=("parallel", "parallel")),
    )(x_in, W, invn)

    # ---- boundary crop + reshape back to (B, C, samples) --------------------
    if fold_batch:
        sig = out.reshape(n_rows_pad, PT)[:BC * n_tiles].reshape(BC, n_tiles * PT)
    else:
        sig = out.reshape(BC, n_rows_pad * PT)
    boundary = L // 2
    sig = sig[:, boundary:P - boundary]
    sig = sig[:, :original_length]
    return sig.reshape(B, C, -1)


# --------------------------- pure-JAX reference ------------------------------

def _reference_istft(data, filt, window, hop, output_length, original_length):
    B, T, F, C = data.shape
    L = window.shape[0]
    x = jnp.swapaxes(data, -1, 2)                         # (B, T, C, F)
    x = x @ filt                                          # (B, T, C, L)
    x = jnp.swapaxes(x, -1, 2)                            # (B, T, L, C)
    x = x * jnp.sum(window)
    x = x * window.reshape(1, 1, L, 1)
    x = jnp.transpose(x, (0, 3, 2, 1)).reshape(B * C, L, T)
    sig = jnp.zeros((B * C, output_length), jnp.float32)
    norm = jnp.zeros((output_length,), jnp.float32)
    for t in range(T):
        sig = sig.at[:, t * hop:t * hop + L].add(x[:, :, t])
        norm = norm.at[t * hop:t * hop + L].add(window ** 2)
    norm = jnp.where(norm < 1e-10, 1.0, norm)
    sig = sig / norm[None, :]
    boundary = L // 2
    sig = sig[:, boundary:output_length - boundary][:, :original_length]
    return sig.reshape(B, C, -1)


# --------------------------------- main ---------------------------------------

if __name__ == "__main__":
    # ISTFT(n_fft=64) -> num_filters=64, filter_length=64, hop_length=16, hann window
    n_fft = 64
    win_length = n_fft
    hop_length = n_fft // 4
    F, L = n_fft, win_length

    key = jax.random.PRNGKey(0)
    k_data1, k_data2, k_filt = jax.random.split(key, 3)
    # deterministic synthetic inverse filterbank, shape (num_filters, filter_length)
    inverse_filters = 0.05 * jax.random.normal(k_filt, (F, L), dtype=jnp.float32)
    window = jnp.asarray(_hann_window(L))

    def run_case(data, fold_batch):
        B, T, _, C = data.shape
        output_length = (T - 1) * hop_length + L
        original_length = output_length - L
        out = istft_pallas(data, inverse_filters, window, hop_length,
                           original_length, fold_batch=fold_batch)
        out = jax.block_until_ready(out)
        ref = _reference_istft(data, inverse_filters, window, hop_length,
                               output_length, original_length)
        assert out.shape == (B, C, original_length), out.shape
        err = float(jnp.max(jnp.abs(out - ref)))
        scale = float(jnp.max(jnp.abs(ref))) + 1.0
        assert err < 2e-2 * scale, f"max abs err {err} (scale {scale})"

    # case 1: short signal -> batch*channels folded into the matmul M dimension
    data1 = jax.random.normal(k_data1, (2, 8, F, 2), dtype=jnp.float32)
    run_case(data1, fold_batch=None)

    # case 2: force the batched-grid path (per-batch row tiling, inv_norm dedup across batch)
    data2 = jax.random.normal(k_data2, (1, 40, F, 2), dtype=jnp.float32)
    run_case(data2, fold_batch=False)

    print("KERNEL_OK")
</pallas_src>

<mosaic_0001>
module attributes {stable_mosaic.version = 11 : i64} {
  func.func @_istft_fused_kernel(%arg0: i32, %arg1: i32, %arg2: memref<1x8x768xbf16, #tpu.memory_space<vmem>>, %arg3: memref<768x128xbf16, #tpu.memory_space<vmem>>, %arg4: memref<8x128xf32, #tpu.memory_space<vmem>>, %arg5: memref<1x8x128xf32, #tpu.memory_space<vmem>>) attributes {dimension_semantics = [#tpu.dimension_semantics<parallel>, #tpu.dimension_semantics<parallel>], iteration_bounds = array<i64: 1, 1>, scalar_prefetch = 0 : i64, scratch_operands = 0 : i64, tpu.core_type = #tpu.core_type<tc>, window_params = [{transform_indices = @transform_0, window_bounds = array<i64: 1, 8, 768>}, {pipeline_mode = #tpu.pipeline_mode<synchronous>, transform_indices = @transform_1, window_bounds = array<i64: 768, 128>}, {transform_indices = @transform_2, window_bounds = array<i64: 8, 128>}, {transform_indices = @transform_3, window_bounds = array<i64: 1, 8, 128>}]} {
    %c0 = arith.constant 0 : index
    %c0_0 = arith.constant 0 : index
    %c0_1 = arith.constant 0 : index
    %0 = vector.load %arg2[%c0, %c0_0, %c0_1] : memref<1x8x768xbf16, #tpu.memory_space<vmem>>, vector<1x8x768xbf16>
    %1 = vector.shape_cast %0 : vector<1x8x768xbf16> to vector<8x768xbf16>
    %c0_2 = arith.constant 0 : index
    %c0_3 = arith.constant 0 : index
    %2 = vector.load %arg3[%c0_2, %c0_3] : memref<768x128xbf16, #tpu.memory_space<vmem>>, vector<768x128xbf16>
    %cst = arith.constant dense<0.000000e+00> : vector<8x128xf32>
    %3 = tpu.matmul %1, %2, %cst {dimension_numbers = #tpu.dot_dimension_numbers<[1], [0], [0], [1], [0, 0, 1, 1], [], []>} : vector<8x768xbf16>, vector<768x128xbf16>, vector<8x128xf32> -> vector<8x128xf32>
    %c0_4 = arith.constant 0 : index
    %c0_5 = arith.constant 0 : index
    %4 = vector.load %arg4[%c0_4, %c0_5] : memref<8x128xf32, #tpu.memory_space<vmem>>, vector<8x128xf32>
    %5 = arith.mulf %3, %4 : vector<8x128xf32>
    %c0_6 = arith.constant 0 : index
    %c0_7 = arith.constant 0 : index
    %c0_8 = arith.constant 0 : index
    %6 = vector.load %arg5[%c0_6, %c0_7, %c0_8] : memref<1x8x128xf32, #tpu.memory_space<vmem>>, vector<1x8x128xf32>
    %7 = vector.shape_cast %6 : vector<1x8x128xf32> to vector<8x128xf32>
    %8 = vector.shape_cast %5 : vector<8x128xf32> to vector<1x8x128xf32>
    tpu.vector_store %arg5[%c0_6, %c0_7, %c0_8], %8 {strides = array<i32>} : memref<1x8x128xf32, #tpu.memory_space<vmem>>, vector<1x8x128xf32>,
    return
  }
  func.func @transform_0(%arg0: i32, %arg1: i32) -> (i32, i32, i32) {
    %c0_i32 = arith.constant 0 : i32
    %c0_i32_0 = arith.constant 0 : i32
    return %arg1, %arg0, %c0_i32 : i32, i32, i32
  }
  func.func @transform_1(%arg0: i32, %arg1: i32) -> (i32, i32) {
    %c0_i32 = arith.constant 0 : i32
    %c0_i32_0 = arith.constant 0 : i32
    %c0_i32_1 = arith.constant 0 : i32
    return %c0_i32, %c0_i32_0 : i32, i32
  }
  func.func @transform_2(%arg0: i32, %arg1: i32) -> (i32, i32) {
    %c0_i32 = arith.constant 0 : i32
    %c0_i32_0 = arith.constant 0 : i32
    return %arg0, %c0_i32 : i32, i32
  }
  func.func @transform_3(%arg0: i32, %arg1: i32) -> (i32, i32, i32) {
    %c0_i32 = arith.constant 0 : i32
    %c0_i32_0 = arith.constant 0 : i32
    return %arg1, %arg0, %c0_i32 : i32, i32, i32
  }
}

</mosaic_0001>

<llo_original>
// kernel: tpu_custom_call.1
$region0: #{tpu_custom_call.1}
  #allocation0 [shape = 'u32[]', space=smem, size = 0x4, offset = 0x4, fixed_abs, tag = 'smem constant byte address 0x4 - core index']
  #allocation1 [shape = 'u32[144,128]{1,0:T(1,128)}', space=vmem, size = 0x12000, scoped, tag = 'internal scratch']
  %s0 = inlined_call_operand.hbm [shape: bf16[1,8,768], index: 0, kind: input, shape index: {}]
  %s1 = inlined_call_operand.hbm [shape: bf16[768,128], index: 1, kind: input, shape index: {}]
  %s2 = inlined_call_operand.hbm [shape: f32[8,128], index: 2, kind: input, shape index: {}]
  %s3 = inlined_call_operand.hbm [shape: f32[1,8,128], index: 3, kind: output, shape index: {}]
  %s4 = sld [smem:[#allocation0]]
  $region34: #{tpu_custom_call.1} parent=0
    _
  %s6 = ssub.s32 1, %s4
  %s7 = scalar_select 0, %s6, %s4
  $region1: #{tpu_custom_call.1} parent=0
    #allocation2 [shape = 'u8[12288]{0}', space=vmem, size = 0x3000, scoped, tag = 'input window, operand 0, single buffered']
    #allocation3 [shape = 's32[1]{0}', space=sflag, size = 0x4, scoped, tag = 'scoped memory for tpu_custom_call.1']
    #allocation4 [shape = 's32[1]{0}', space=sflag, size = 0x4, scoped, tag = 'scoped memory for tpu_custom_call.1']
    #allocation5 [shape = 'u8[196608]{0}', space=vmem, size = 0x30000, scoped, tag = 'input window, operand 1, single buffered']
    #allocation6 [shape = 's32[1]{0}', space=sflag, size = 0x4, scoped, tag = 'scoped memory for tpu_custom_call.1']
    #allocation7 [shape = 'u8[4096]{0}', space=vmem, size = 0x1000, scoped, tag = 'input window, operand 2, single buffered']
    #allocation8 [shape = 'u8[4096]{0}', space=vmem, size = 0x1000, scoped, tag = 'output window, operand 0, single buffered']
    %8 = vsyncpa [#allocation3], 0
    %9 = vsyncpa [#allocation6], 0
    %10 = vsyncpa [#allocation4], 0
    // Predicated region
    $region2: #{tpu_custom_call.1} parent=1 // pred_check
      _
    $region3: #{tpu_custom_call.1} parent=1 // pred_check_branch
      %12 = sbr.rel (0) target = $region5
    $region4: #{tpu_custom_call.1} parent=1 // pred_region
      %s14 = ssub.s32 384, 384
      %15 = vsyncadd [#allocation3], %s14
      %s17 = sshll.u32 [#allocation2], 4
      %s18 = int_to_ptr.vmem [resolvable:$true] %s17
      %20 = dma.hbm_to_vmem [thread:$0]  %s0, 384, %s18, [#allocation3]
    $region5: #{tpu_custom_call.1} parent=1 // pred_fallthru
      _
    // Predicated region
    $region6: #{tpu_custom_call.1} parent=1 // pred_check
      _
    $region7: #{tpu_custom_call.1} parent=1 // pred_check_branch
      %22 = sbr.rel (0) target = $region9
    $region8: #{tpu_custom_call.1} parent=1 // pred_region
      %s24 = ssub.s32 6144, 6144
      %25 = vsyncadd [#allocation6], %s24
      %s26 = sshll.u32 [#allocation5], 4
      %s27 = int_to_ptr.vmem [resolvable:$true] %s26
      %32 = dma.hbm_to_vmem [thread:$0]  %s1, 6144, %s27, [#allocation6], 64, 64, 4
    $region9: #{tpu_custom_call.1} parent=1 // pred_fallthru
      _
    // Predicated region
    $region10: #{tpu_custom_call.1} parent=1 // pred_check
      _
    $region11: #{tpu_custom_call.1} parent=1 // pred_check_branch
      %34 = sbr.rel (0) target = $region13
    $region12: #{tpu_custom_call.1} parent=1 // pred_region
      %s36 = ssub.s32 128, 128
      %37 = vsyncadd [#allocation6], %s36
      %s39 = sshll.u32 [#allocation7], 4
      %s40 = int_to_ptr.vmem [resolvable:$true] %s39
      %42 = dma.hbm_to_vmem [thread:$0]  %s2, 128, %s40, [#allocation6]
    $region13: #{tpu_custom_call.1} parent=1 // pred_fallthru
      _
    // Predicated region
    $region14: #{tpu_custom_call.1} parent=1 // pred_check
      _
    $region15: #{tpu_custom_call.1} parent=1 // pred_check_branch
      %44 = sbr.rel (0) target = $region17
    $region16: #{tpu_custom_call.1} parent=1 // pred_region
      %45 = dma.done [#allocation3], 384
    $region17: #{tpu_custom_call.1} parent=1 // pred_fallthru
      _
    // Predicated region
    $region18: #{tpu_custom_call.1} parent=1 // pred_check
      _
    $region19: #{tpu_custom_call.1} parent=1 // pred_check_branch
      %47 = sbr.rel (0) target = $region21
    $region20: #{tpu_custom_call.1} parent=1 // pred_region
      %48 = dma.done [#allocation6], 6144
    $region21: #{tpu_custom_call.1} parent=1 // pred_fallthru
      _
    // Predicated region
    $region22: #{tpu_custom_call.1} parent=1 // pred_check
      _
    $region23: #{tpu_custom_call.1} parent=1 // pred_check_branch
      %50 = sbr.rel (0) target = $region25
    $region24: #{tpu_custom_call.1} parent=1 // pred_region
      %51 = dma.done [#allocation6], 128
    $region25: #{tpu_custom_call.1} parent=1 // pred_fallthru
      _
    %v53 = vld [vmem:[#allocation2] sm:$0xff]
    %v54 = vld [vmem:[#allocation2 + $0x8] sm:$0xff]
    %v55 = vld [vmem:[#allocation2 + $0x10] sm:$0xff]
    %v56 = vld [vmem:[#allocation5] sm:$0xf]
    %v57 = vld [vmem:[#allocation5 + $0x4] sm:$0xf]
    %v58 = vld [vmem:[#allocation5 + $0x8] sm:$0xf]
    %v59 = vld [vmem:[#allocation5 + $0xc] sm:$0xf]
    %v60 = vld [vmem:[#allocation5 + $0x10] sm:$0xf]
    %v61 = vld [vmem:[#allocation5 + $0x14] sm:$0xf]
    %v62 = vld [vmem:[#allocation5 + $0x18] sm:$0xf]
    %v63 = vld [vmem:[#allocation5 + $0x1c] sm:$0xf]
    %v64 = vld [vmem:[#allocation5 + $0x20] sm:$0xf]
    %v65 = vld [vmem:[#allocation5 + $0x24] sm:$0xf]
    %v66 = vld [vmem:[#allocation5 + $0x28] sm:$0xf]
    %v67 = vld [vmem:[#allocation5 + $0x2c] sm:$0xf]
    %v68 = vld [vmem:[#allocation5 + $0x30] sm:$0xf]
    %v69 = vld [vmem:[#allocation5 + $0x34] sm:$0xf]
    %v70 = vld [vmem:[#allocation5 + $0x38] sm:$0xf]
    %v71 = vld [vmem:[#allocation5 + $0x3c] sm:$0xf]
    %v72 = vld [vmem:[#allocation5 + $0x40] sm:$0xf]
    %v73 = vld [vmem:[#allocation5 + $0x44] sm:$0xf]
    %v74 = vld [vmem:[#allocation5 + $0x48] sm:$0xf]
    %v75 = vld [vmem:[#allocation5 + $0x4c] sm:$0xf]
    %v76 = vld [vmem:[#allocation5 + $0x50] sm:$0xf]
    %v77 = vld [vmem:[#allocation5 + $0x54] sm:$0xf]
    %v78 = vld [vmem:[#allocation5 + $0x58] sm:$0xf]
    %v79 = vld [vmem:[#allocation5 + $0x5c] sm:$0xf]
    %v80 = vld [vmem:[#allocation5 + $0x60] sm:$0xf]
    %v81 = vld [vmem:[#allocation5 + $0x64] sm:$0xf]
    %v82 = vld [vmem:[#allocation5 + $0x68] sm:$0xf]
    %v83 = vld [vmem:[#allocation5 + $0x6c] sm:$0xf]
    %v84 = vld [vmem:[#allocation5 + $0x70] sm:$0xf]
    %v85 = vld [vmem:[#allocation5 + $0x74] sm:$0xf]
    %v86 = vld [vmem:[#allocation5 + $0x78] sm:$0xf]
    %v87 = vld [vmem:[#allocation5 + $0x7c] sm:$0xf]
    %v88 = vld [vmem:[#allocation5 + $0x80] sm:$0xf]
    %v89 = vld [vmem:[#allocation5 + $0x84] sm:$0xf]
    %v90 = vld [vmem:[#allocation5 + $0x88] sm:$0xf]
    %v91 = vld [vmem:[#allocation5 + $0x8c] sm:$0xf]
    %v92 = vld [vmem:[#allocation5 + $0x90] sm:$0xf]
    %v93 = vld [vmem:[#allocation5 + $0x94] sm:$0xf]
    %v94 = vld [vmem:[#allocation5 + $0x98] sm:$0xf]
    %v95 = vld [vmem:[#allocation5 + $0x9c] sm:$0xf]
    %v96 = vld [vmem:[#allocation5 + $0xa0] sm:$0xf]
    %v97 = vld [vmem:[#allocation5 + $0xa4] sm:$0xf]
    %v98 = vld [vmem:[#allocation5 + $0xa8] sm:$0xf]
    %v99 = vld [vmem:[#allocation5 + $0xac] sm:$0xf]
    %v100 = vld [vmem:[#allocation5 + $0xb0] sm:$0xf]
    %v101 = vld [vmem:[#allocation5 + $0xb4] sm:$0xf]
    %v102 = vld [vmem:[#allocation5 + $0xb8] sm:$0xf]
    %v103 = vld [vmem:[#allocation5 + $0xbc] sm:$0xf]
    %v104 = vld [vmem:[#allocation5 + $0xc0] sm:$0xf]
    %v105 = vld [vmem:[#allocation5 + $0xc4] sm:$0xf]
    %v106 = vld [vmem:[#allocation5 + $0xc8] sm:$0xf]
    %v107 = vld [vmem:[#allocation5 + $0xcc] sm:$0xf]
    %v108 = vld [vmem:[#allocation5 + $0xd0] sm:$0xf]
    %v109 = vld [vmem:[#allocation5 + $0xd4] sm:$0xf]
    %v110 = vld [vmem:[#allocation5 + $0xd8] sm:$0xf]
    %v111 = vld [vmem:[#allocation5 + $0xdc] sm:$0xf]
    %v112 = vld [vmem:[#allocation5 + $0xe0] sm:$0xf]
    %v113 = vld [vmem:[#allocation5 + $0xe4] sm:$0xf]
    %v114 = vld [vmem:[#allocation5 + $0xe8] sm:$0xf]
    %v115 = vld [vmem:[#allocation5 + $0xec] sm:$0xf]
    %v116 = vld [vmem:[#allocation5 + $0xf0] sm:$0xf]
    %v117 = vld [vmem:[#allocation5 + $0xf4] sm:$0xf]
    %v118 = vld [vmem:[#allocation5 + $0xf8] sm:$0xf]
    %v119 = vld [vmem:[#allocation5 + $0xfc] sm:$0xf]
    %v120 = vld [vmem:[#allocation5 + $0x100] sm:$0xf]
    %v121 = vld [vmem:[#allocation5 + $0x104] sm:$0xf]
    %v122 = vld [vmem:[#allocation5 + $0x108] sm:$0xf]
    %v123 = vld [vmem:[#allocation5 + $0x10c] sm:$0xf]
    %v124 = vld [vmem:[#allocation5 + $0x110] sm:$0xf]
    %v125 = vld [vmem:[#allocation5 + $0x114] sm:$0xf]
    %v126 = vld [vmem:[#allocation5 + $0x118] sm:$0xf]
    %v127 = vld [vmem:[#allocation5 + $0x11c] sm:$0xf]
    %v128 = vld [vmem:[#allocation5 + $0x120] sm:$0xf]
    %v129 = vld [vmem:[#allocation5 + $0x124] sm:$0xf]
    %v130 = vld [vmem:[#allocation5 + $0x128] sm:$0xf]
    %v131 = vld [vmem:[#allocation5 + $0x12c] sm:$0xf]
    %v132 = vld [vmem:[#allocation5 + $0x130] sm:$0xf]
    %v133 = vld [vmem:[#allocation5 + $0x134] sm:$0xf]
    %v134 = vld [vmem:[#allocation5 + $0x138] sm:$0xf]
    %v135 = vld [vmem:[#allocation5 + $0x13c] sm:$0xf]
    %v136 = vld [vmem:[#allocation5 + $0x140] sm:$0xf]
    %v137 = vld [vmem:[#allocation5 + $0x144] sm:$0xf]
    %v138 = vld [vmem:[#allocation5 + $0x148] sm:$0xf]
    %v139 = vld [vmem:[#allocation5 + $0x14c] sm:$0xf]
    %v140 = vld [vmem:[#allocation5 + $0x150] sm:$0xf]
    %v141 = vld [vmem:[#allocation5 + $0x154] sm:$0xf]
    %v142 = vld [vmem:[#allocation5 + $0x158] sm:$0xf]
    %v143 = vld [vmem:[#allocation5 + $0x15c] sm:$0xf]
    %v144 = vld [vmem:[#allocation5 + $0x160] sm:$0xf]
    %v145 = vld [vmem:[#allocation5 + $0x164] sm:$0xf]
    %v146 = vld [vmem:[#allocation5 + $0x168] sm:$0xf]
    %v147 = vld [vmem:[#allocation5 + $0x16c] sm:$0xf]
    %v148 = vld [vmem:[#allocation5 + $0x170] sm:$0xf]
    %v149 = vld [vmem:[#allocation5 + $0x174] sm:$0xf]
    %v150 = vld [vmem:[#allocation5 + $0x178] sm:$0xf]
    %v151 = vld [vmem:[#allocation5 + $0x17c] sm:$0xf]
    %v155 = vunpack.c.l.b16 %v53
    %v156 = vunpack.c.h.b16 %v53
    %v157 = vunpack.c.l.b16 %v54
    %v158 = vunpack.c.h.b16 %v54
    %v159 = vunpack.c.l.b16 %v55
    %v160 = vunpack.c.h.b16 %v55
    %v161 = vpack.c.b16 %v155, %v155
    %v162 = vpack.c.b16 %v156, %v156
    %v163 = vpack.c.b16 %v157, %v157
    %v164 = vpack.c.b16 %v158, %v158
    %v165 = vpack.c.b16 %v159, %v159
    %v166 = vpack.c.b16 %v160, %v160
    %v269 = vunpack.c.l.b16 %v56
    %v270 = vunpack.c.l.b16 %v57
    %v271 = vunpack.c.l.b16 %v58
    %v272 = vunpack.c.l.b16 %v59
    %v273 = vunpack.c.l.b16 %v60
    %v274 = vunpack.c.l.b16 %v61
    %v275 = vunpack.c.l.b16 %v62
    %v276 = vunpack.c.l.b16 %v63
    %v277 = vunpack.c.l.b16 %v64
    %v278 = vunpack.c.l.b16 %v65
    %v279 = vunpack.c.l.b16 %v66
    %v280 = vunpack.c.l.b16 %v67
    %v281 = vunpack.c.l.b16 %v68
    %v282 = vunpack.c.l.b16 %v69
    %v283 = vunpack.c.l.b16 %v70
    %v284 = vunpack.c.l.b16 %v71
    %v285 = vunpack.c.l.b16 %v72
    %v286 = vunpack.c.l.b16 %v73
    %v287 = vunpack.c.l.b16 %v74
    %v288 = vunpack.c.l.b16 %v75
    %v289 = vunpack.c.l.b16 %v76
    %v290 = vunpack.c.l.b16 %v77
    %v291 = vunpack.c.l.b16 %v78
    %v292 = vunpack.c.l.b16 %v79
    %v293 = vunpack.c.l.b16 %v80
    %v294 = vunpack.c.l.b16 %v81
    %v295 = vunpack.c.l.b16 %v82
    %v296 = vunpack.c.l.b16 %v83
    %v297 = vunpack.c.l.b16 %v84
    %v298 = vunpack.c.l.b16 %v85
    %v299 = vunpack.c.l.b16 %v86
    %v300 = vunpack.c.l.b16 %v87
    %v301 = vunpack.c.l.b16 %v88
    %v302 = vunpack.c.l.b16 %v89
    %v303 = vunpack.c.l.b16 %v90
    %v304 = vunpack.c.l.b16 %v91
    %v305 = vunpack.c.l.b16 %v92
    %v306 = vunpack.c.l.b16 %v93
    %v307 = vunpack.c.l.b16 %v94
    %v308 = vunpack.c.l.b16 %v95
    %v309 = vunpack.c.l.b16 %v96
    %v310 = vunpack.c.l.b16 %v97
    %v311 = vunpack.c.l.b16 %v98
    %v312 = vunpack.c.l.b16 %v99
    %v313 = vunpack.c.l.b16 %v100
    %v314 = vunpack.c.l.b16 %v101
    %v315 = vunpack.c.l.b16 %v102
    %v316 = vunpack.c.l.b16 %v103
    %v317 = vunpack.c.l.b16 %v104
    %v318 = vunpack.c.l.b16 %v105
    %v319 = vunpack.c.l.b16 %v106
    %v320 = vunpack.c.l.b16 %v107
    %v321 = vunpack.c.l.b16 %v108
    %v322 = vunpack.c.l.b16 %v109
    %v323 = vunpack.c.l.b16 %v110
    %v324 = vunpack.c.l.b16 %v111
    %v325 = vunpack.c.l.b16 %v112
    %v326 = vunpack.c.l.b16 %v113
    %v327 = vunpack.c.l.b16 %v114
    %v328 = vunpack.c.l.b16 %v115
    %v329 = vunpack.c.l.b16 %v116
    %v330 = vunpack.c.l.b16 %v117
    %v331 = vunpack.c.l.b16 %v118
    %v332 = vunpack.c.l.b16 %v119
    %v333 = vunpack.c.l.b16 %v120
    %v334 = vunpack.c.l.b16 %v121
    %v335 = vunpack.c.l.b16 %v122
    %v336 = vunpack.c.l.b16 %v123
    %v337 = vunpack.c.l.b16 %v124
    %v338 = vunpack.c.l.b16 %v125
    %v339 = vunpack.c.l.b16 %v126
    %v340 = vunpack.c.l.b16 %v127
    %v341 = vunpack.c.l.b16 %v128
    %v342 = vunpack.c.l.b16 %v129
    %v343 = vunpack.c.l.b16 %v130
    %v344 = vunpack.c.l.b16 %v131
    %v345 = vunpack.c.l.b16 %v132
    %v346 = vunpack.c.l.b16 %v133
    %v347 = vunpack.c.l.b16 %v134
    %v348 = vunpack.c.l.b16 %v135
    %v349 = vunpack.c.l.b16 %v136
    %v350 = vunpack.c.l.b16 %v137
    %v351 = vunpack.c.l.b16 %v138
    %v352 = vunpack.c.l.b16 %v139
    %v353 = vunpack.c.l.b16 %v140
    %v354 = vunpack.c.l.b16 %v141
    %v355 = vunpack.c.l.b16 %v142
    %v356 = vunpack.c.l.b16 %v143
    %v357 = vunpack.c.l.b16 %v144
    %v358 = vunpack.c.l.b16 %v145
    %v359 = vunpack.c.l.b16 %v146
    %v360 = vunpack.c.l.b16 %v147
    %v361 = vunpack.c.l.b16 %v148
    %v362 = vunpack.c.l.b16 %v149
    %v363 = vunpack.c.l.b16 %v150
    %v364 = vunpack.c.l.b16 %v151
    %v365 = vpack.c.b16 %v270, %v269
    %v366 = vpack.c.b16 %v272, %v271
    %v367 = vpack.c.b16 %v274, %v273
    %v368 = vpack.c.b16 %v276, %v275
    %v369 = vpack.c.b16 %v278, %v277
    %v370 = vpack.c.b16 %v280, %v279
    %v371 = vpack.c.b16 %v282, %v281
    %v372 = vpack.c.b16 %v284, %v283
    %v373 = vpack.c.b16 %v286, %v285
    %v374 = vpack.c.b16 %v288, %v287
    %v375 = vpack.c.b16 %v290, %v289
    %v376 = vpack.c.b16 %v292, %v291
    %v377 = vpack.c.b16 %v294, %v293
    %v378 = vpack.c.b16 %v296, %v295
    %v379 = vpack.c.b16 %v298, %v297
    %v380 = vpack.c.b16 %v300, %v299
    %v381 = vpack.c.b16 %v302, %v301
    %v382 = vpack.c.b16 %v304, %v303
    %v383 = vpack.c.b16 %v306, %v305
    %v384 = vpack.c.b16 %v308, %v307
    %v385 = vpack.c.b16 %v310, %v309
    %v386 = vpack.c.b16 %v312, %v311
    %v387 = vpack.c.b16 %v314, %v313
    %v388 = vpack.c.b16 %v316, %v315
    %v389 = vpack.c.b16 %v318, %v317
    %v390 = vpack.c.b16 %v320, %v319
    %v391 = vpack.c.b16 %v322, %v321
    %v392 = vpack.c.b16 %v324, %v323
    %v393 = vpack.c.b16 %v326, %v325
    %v394 = vpack.c.b16 %v328, %v327
    %v395 = vpack.c.b16 %v330, %v329
    %v396 = vpack.c.b16 %v332, %v331
    %v397 = vpack.c.b16 %v334, %v333
    %v398 = vpack.c.b16 %v336, %v335
    %v399 = vpack.c.b16 %v338, %v337
    %v400 = vpack.c.b16 %v340, %v339
    %v401 = vpack.c.b16 %v342, %v341
    %v402 = vpack.c.b16 %v344, %v343
    %v403 = vpack.c.b16 %v346, %v345
    %v404 = vpack.c.b16 %v348, %v347
    %v405 = vpack.c.b16 %v350, %v349
    %v406 = vpack.c.b16 %v352, %v351
    %v407 = vpack.c.b16 %v354, %v353
    %v408 = vpack.c.b16 %v356, %v355
    %v409 = vpack.c.b16 %v358, %v357
    %v410 = vpack.c.b16 %v360, %v359
    %v411 = vpack.c.b16 %v362, %v361
    %v412 = vpack.c.b16 %v364, %v363
    %461 = vmatprep.subr.bf16.mxu0 0
    %462 = vmatpush1.bf16.msra.mxu0 %v372
    %463 = vmatprep.subr.bf16.mxu0 0
    %464 = vmatpush1.bf16.msra.mxu0 %v371
    %465 = vmatprep.subr.bf16.mxu0 0
    %466 = vmatpush1.bf16.msra.mxu0 %v370
    %467 = vmatprep.subr.bf16.mxu0 0
    %468 = vmatpush1.bf16.msra.mxu0 %v369
    %469 = vmatprep.subr.bf16.mxu0 0
    %470 = vmatpush1.bf16.msra.mxu0 %v368
    %471 = vmatprep.subr.bf16.mxu0 0
    %472 = vmatpush1.bf16.msra.mxu0 %v367
    %473 = vmatprep.subr.bf16.mxu0 0
    %474 = vmatpush1.bf16.msra.mxu0 %v366
    %475 = vmatprep.subr.bf16.mxu0 0
    %476 = vmatpush1.bf16.msra.mxu0 %v365
    %477 = vmatprep.subr.bf16.mxu0 0
    %478 = vmatpush2.bf16.msra.mxu0 %v380
    %479 = vmatprep.subr.bf16.mxu0 0
    %480 = vmatpush2.bf16.msra.mxu0 %v379
    %481 = vmatprep.subr.bf16.mxu0 0
    %482 = vmatpush2.bf16.msra.mxu0 %v378
    %483 = vmatprep.subr.bf16.mxu0 0
    %484 = vmatpush2.bf16.msra.mxu0 %v377
    %485 = vmatprep.subr.bf16.mxu0 0
    %486 = vmatpush2.bf16.msra.mxu0 %v376
    %487 = vmatprep.subr.bf16.mxu0 0
    %488 = vmatpush2.bf16.msra.mxu0 %v375
    %489 = vmatprep.subr.bf16.mxu0 0
    %490 = vmatpush2.bf16.msra.mxu0 %v374
    %491 = vmatprep.subr.bf16.mxu0 0
    %492 = vmatpush2.bf16.msra.mxu0 %v373
    %493 = vmatprep.mubr.bf16.mxu0 %v162
    %494 = vmatmul.mubr.bf16.gmra.mxu0 %v161
    %v495 = vpop.f32.mrf.mxu0
    %v496 = vadd.f32 0.0, %v495
    %v497 = vpop.f32.mrf.mxu0
    %v498 = vpop.f32.mrf.mxu0
    %v499 = vpop.f32.mrf.mxu0
    %500 = vdwg.mxu0
    %501 = vmatprep.subr.bf16.mxu0 0
    %502 = vmatpush1.bf16.msra.mxu0 %v388
    %503 = vmatprep.subr.bf16.mxu0 0
    %504 = vmatpush1.bf16.msra.mxu0 %v387
    %505 = vmatprep.subr.bf16.mxu0 0
    %506 = vmatpush1.bf16.msra.mxu0 %v386
    %507 = vmatprep.subr.bf16.mxu0 0
    %508 = vmatpush1.bf16.msra.mxu0 %v385
    %509 = vmatprep.subr.bf16.mxu0 0
    %510 = vmatpush1.bf16.msra.mxu0 %v384
    %511 = vmatprep.subr.bf16.mxu0 0
    %512 = vmatpush1.bf16.msra.mxu0 %v383
    %513 = vmatprep.subr.bf16.mxu0 0
    %514 = vmatpush1.bf16.msra.mxu0 %v382
    %515 = vmatprep.subr.bf16.mxu0 0
    %516 = vmatpush1.bf16.msra.mxu0 %v381
    %517 = vmatprep.subr.bf16.mxu0 0
    %518 = vmatpush2.bf16.msra.mxu0 %v396
    %519 = vmatprep.subr.bf16.mxu0 0
    %520 = vmatpush2.bf16.msra.mxu0 %v395
    %521 = vmatprep.subr.bf16.mxu0 0
    %522 = vmatpush2.bf16.msra.mxu0 %v394
    %523 = vmatprep.subr.bf16.mxu0 0
    %524 = vmatpush2.bf16.msra.mxu0 %v393
    %525 = vmatprep.subr.bf16.mxu0 0
    %526 = vmatpush2.bf16.msra.mxu0 %v392
    %527 = vmatprep.subr.bf16.mxu0 0
    %528 = vmatpush2.bf16.msra.mxu0 %v391
    %529 = vmatprep.subr.bf16.mxu0 0
    %530 = vmatpush2.bf16.msra.mxu0 %v390
    %531 = vmatprep.subr.bf16.mxu0 0
    %532 = vmatpush2.bf16.msra.mxu0 %v389
    %533 = vmatprep.mubr.bf16.mxu0 %v164
    %534 = vmatmul.mubr.bf16.gmra.mxu0 %v163
    %v535 = vpop.f32.mrf.mxu0
    %v536 = vadd.f32 %v496, %v535
    %v537 = vpop.f32.mrf.mxu0
    %v538 = vpop.f32.mrf.mxu0
    %v539 = vpop.f32.mrf.mxu0
    %540 = vdwg.mxu0
    %541 = vmatprep.subr.bf16.mxu0 0
    %542 = vmatpush1.bf16.msra.mxu0 %v404
    %543 = vmatprep.subr.bf16.mxu0 0
    %544 = vmatpush1.bf16.msra.mxu0 %v403
    %545 = vmatprep.subr.bf16.mxu0 0
    %546 = vmatpush1.bf16.msra.mxu0 %v402
    %547 = vmatprep.subr.bf16.mxu0 0
    %548 = vmatpush1.bf16.msra.mxu0 %v401
    %549 = vmatprep.subr.bf16.mxu0 0
    %550 = vmatpush1.bf16.msra.mxu0 %v400
    %551 = vmatprep.subr.bf16.mxu0 0
    %552 = vmatpush1.bf16.msra.mxu0 %v399
    %553 = vmatprep.subr.bf16.mxu0 0
    %554 = vmatpush1.bf16.msra.mxu0 %v398
    %555 = vmatprep.subr.bf16.mxu0 0
    %556 = vmatpush1.bf16.msra.mxu0 %v397
    %557 = vmatprep.subr.bf16.mxu0 0
    %558 = vmatpush2.bf16.msra.mxu0 %v412
    %559 = vmatprep.subr.bf16.mxu0 0
    %560 = vmatpush2.bf16.msra.mxu0 %v411
    %561 = vmatprep.subr.bf16.mxu0 0
    %562 = vmatpush2.bf16.msra.mxu0 %v410
    %563 = vmatprep.subr.bf16.mxu0 0
    %564 = vmatpush2.bf16.msra.mxu0 %v409
    %565 = vmatprep.subr.bf16.mxu0 0
    %566 = vmatpush2.bf16.msra.mxu0 %v408
    %567 = vmatprep.subr.bf16.mxu0 0
    %568 = vmatpush2.bf16.msra.mxu0 %v407
    %569 = vmatprep.subr.bf16.mxu0 0
    %570 = vmatpush2.bf16.msra.mxu0 %v406
    %571 = vmatprep.subr.bf16.mxu0 0
    %572 = vmatpush2.bf16.msra.mxu0 %v405
    %573 = vmatprep.mubr.bf16.mxu0 %v166
    %574 = vmatmul.mubr.bf16.gmra.mxu0 %v165
    %v575 = vpop.f32.mrf.mxu0
    %v576 = vadd.f32 %v536, %v575
    %v577 = vpop.f32.mrf.mxu0
    %v578 = vpop.f32.mrf.mxu0
    %v579 = vpop.f32.mrf.mxu0
    %580 = vdwg.mxu0
    %v581 = vld [vmem:[#allocation7] sm:$0xff]
    %v582 = vmul.f32 %v576, %v581
    %583 = vst [vmem:[#allocation8] sm:$0xff] %v582
    // Predicated region
    $region26: #{tpu_custom_call.1} parent=1 // pred_check
      _
    $region27: #{tpu_custom_call.1} parent=1 // pred_check_branch
      %585 = sbr.rel (0) target = $region29
    $region28: #{tpu_custom_call.1} parent=1 // pred_region
      %s587 = ssub.s32 128, 128
      %588 = vsyncadd [#allocation4], %s587
      %s590 = sshll.u32 [#allocation8], 4
      %s591 = int_to_ptr.vmem [resolvable:$true] %s590
      %593 = dma.vmem_to_hbm [thread:$0]  %s591, 128, %s3, [#allocation4]
    $region29: #{tpu_custom_call.1} parent=1 // pred_fallthru
      _
    // Predicated region
    $region30: #{tpu_custom_call.1} parent=1 // pred_check
      _
    $region31: #{tpu_custom_call.1} parent=1 // pred_check_branch
      %595 = sbr.rel (0) target = $region33
    $region32: #{tpu_custom_call.1} parent=1 // pred_region
      %596 = dma.done [#allocation4], 128
    $region33: #{tpu_custom_call.1} parent=1 // pred_fallthru
      _
    %597 = vsyncpa [#allocation3], 1
    %598 = vsyncpa [#allocation6], 1
    %599 = vsyncpa [#allocation4], 1

</llo_original>
